<compile_context>
chip_gen: v5e
topology: v5e:2x2
jax: 0.10.0
libtpu: 0.0.40
codegen_flags: <defaults>
</compile_context>

<pallas_src>
import functools

import jax
import jax.numpy as jnp
from jax.experimental import pallas as pl
from jax.experimental.pallas import tpu as pltpu

_PAIRWISE_EPS = 1e-6  # matches torch.nn.functional.pairwise_distance default


def _contrastive_loss_kernel(out1_ref, out2_ref, label_ref, partial_ref,
                             acc_ref, *, margin, true_b, tile_b,
                             blocks_per_core, needs_mask):
    c = pl.program_id(0)   # partial-sum ("core") index
    i = pl.program_id(1)   # reduction step within this partial

    # Zero the resident (TB, 1) vector accumulator at the start of each partial.
    @pl.when(i == 0)
    def _():
        acc_ref[...] = jnp.zeros_like(acc_ref)

    # Upcast (supports bf16 inputs) and compute the pairwise distance terms.
    o1 = out1_ref[...].astype(jnp.float32)                            # (TB, D)
    o2 = out2_ref[...].astype(jnp.float32)
    diff = o1 - o2 + _PAIRWISE_EPS
    sq_dist = jnp.sum(diff * diff, axis=-1, keepdims=True)            # (TB, 1)
    dist = jnp.sqrt(sq_dist)

    label = label_ref[...].astype(jnp.float32)                        # (TB, 1)
    hinge = jnp.maximum(margin - dist, 0.0)
    per_row = (1.0 - label) * sq_dist + label * (hinge * hinge)       # (TB, 1)

    # Mask rows beyond the true batch (ragged last tile / over-covered blocks).
    if needs_mask:
        row = ((c * blocks_per_core + i) * tile_b
               + jax.lax.broadcasted_iota(jnp.int32, per_row.shape, 0))
        per_row = jnp.where(row < true_b, per_row, 0.0)

    # Per-step work is pure VPU add; cross-sublane reduce only at the end.
    acc_ref[...] += per_row

    @pl.when(i == pl.num_programs(1) - 1)
    def _():
        partial_ref[...] = jnp.sum(acc_ref[...], keepdims=True)       # (1, 1)


def _vmem_input_budget_bytes():
    """VMEM budget for the pipelined input/label/accumulator windows."""
    try:
        info = pltpu.get_tpu_info()
        cap = int(getattr(info, "vmem_capacity_bytes", 64 << 20))
    except Exception:  # not queryable at trace time -> conservative (v7x TC)
        cap = 64 << 20
    # Spend ~1/4 of physical VMEM on the pipeline windows:
    # 128 MiB (v5e/v6e) -> 24 MiB, 64 MiB (v7x) -> 16 MiB.
    return max(8 << 20, min(cap // 4, 24 << 20))


def _pick_tile_b(B, D, in_itemsize, budget_bytes):
    """Rows per grid step, sized against the *lane-padded* VMEM footprint."""
    d_pad = ((D + 127) // 128) * 128
    # Per tile row: 2 inputs x 2 pipeline buffers (lane-padded, input dtype)
    #             + label block x 2 buffers (pads to 128 lanes, f32)
    #             + (TB, 1) f32 accumulator (pads to 128 lanes).
    bytes_per_row = 2 * 2 * d_pad * in_itemsize + 2 * 128 * 4 + 128 * 4
    tb = budget_bytes // bytes_per_row
    tb = max(8, tb - (tb % 8))     # multiple of 8 -> satisfies sublane rule
    if tb >= B:
        return B                   # single full block; any B is legal
    return int(tb)


def contrastive_loss(out1, out2, label, margin=0.5, tile_b=None):
    """out1, out2: (B, D) f32/bf16; label: (B, 1). Returns scalar f32 loss."""
    B, D = out1.shape
    assert out2.shape == (B, D)
    assert out1.dtype == out2.dtype
    assert label.shape == (B, 1)
    label = label.astype(jnp.float32)

    in_itemsize = jnp.dtype(out1.dtype).itemsize
    budget = _vmem_input_budget_bytes()
    tb = _pick_tile_b(B, D, in_itemsize, budget) if tile_b is None else int(tile_b)
    if tb < B:
        assert tb % 8 == 0, "partial-batch tiles must be a multiple of 8 rows"
    nb_total = pl.cdiv(B, tb)

    # Leading "parallel" axis: 2 partial sums (one per v7x TensorCore); on
    # single-core chips it is just a cheap sequential outer loop.
    num_partials = 2 if nb_total >= 2 else 1
    bpc = pl.cdiv(nb_total, num_partials)
    needs_mask = (num_partials * bpc * tb) != B
    last_block = nb_total - 1

    def row_map(c, i):
        # Clamp so over-covered blocks never DMA past the array; their rows
        # are fully masked inside the kernel anyway.
        return (jnp.minimum(c * bpc + i, last_block), 0)

    kernel = functools.partial(
        _contrastive_loss_kernel, margin=float(margin), true_b=B, tile_b=tb,
        blocks_per_core=bpc, needs_mask=needs_mask)

    # Explicit scoped-VMEM limit (lane-padded estimate + headroom) so the
    # chosen tile is not squeezed by the v5e 16 MiB default.
    d_pad = ((D + 127) // 128) * 128
    est_vmem = (2 * 2 * tb * d_pad * in_itemsize      # 2 inputs, double-buffered
                + 2 * tb * 128 * 4                    # label, double-buffered
                + tb * 128 * 4)                       # (TB, 1) accumulator
    vmem_limit = int(min(max(est_vmem * 5 // 4 + (1 << 20), 16 << 20), 32 << 20))

    # Advisory cost hint (mem-bound elementwise + reduce).
    flops = 4 * B * D + 8 * B
    bytes_accessed = 2 * B * D * in_itemsize + B * 4 + num_partials * 4

    partials = pl.pallas_call(
        kernel,
        out_shape=jax.ShapeDtypeStruct((num_partials, 1), jnp.float32),
        grid=(num_partials, bpc),
        in_specs=[
            pl.BlockSpec((tb, D), row_map),
            pl.BlockSpec((tb, D), row_map),
            pl.BlockSpec((tb, 1), row_map),
        ],
        # Same (c, 0) output block across the inner reduction axis -> the
        # per-core partial stays resident; written back once per partial.
        out_specs=pl.BlockSpec((1, 1), lambda c, i: (c, 0)),
        scratch_shapes=[pltpu.VMEM((tb, 1), jnp.float32)],
        compiler_params=pltpu.CompilerParams(
            dimension_semantics=("parallel", "arbitrary"),
            vmem_limit_bytes=vmem_limit),
        cost_estimate=pl.CostEstimate(
            flops=flops, transcendentals=B, bytes_accessed=bytes_accessed),
    )(out1, out2, label)

    return jnp.sum(partials) / jnp.float32(B)


def _reference_loss(out1, out2, label, margin=0.5):
    diff = out1 - out2 + _PAIRWISE_EPS
    d = jnp.sqrt(jnp.sum(diff * diff, axis=-1, keepdims=True))
    return jnp.mean((1.0 - label) * d * d
                    + label * jnp.maximum(margin - d, 0.0) ** 2)


if __name__ == "__main__":
    key = jax.random.PRNGKey(0)
    keys = jax.random.split(key, 9)

    # Case 1: small siamese-head shapes (single block, single partial).
    B, D = 8, 32
    out1 = jax.random.normal(keys[0], (B, D), dtype=jnp.float32)
    out2 = jax.random.normal(keys[1], (B, D), dtype=jnp.float32)
    label = jax.random.bernoulli(keys[2], 0.5, (B, 1)).astype(jnp.float32)

    loss = jax.block_until_ready(contrastive_loss(out1, out2, label, margin=0.5))
    ref = _reference_loss(out1, out2, label, margin=0.5)
    assert jnp.allclose(loss, ref, rtol=1e-5, atol=1e-6), (loss, ref)

    # Case 2: multi-tile + 2-way partial split with a ragged, over-covered
    # last tile (exercises per-partial accumulator reset, index clamping and
    # padded-row masking).
    B2, D2, TB2 = 20, 32, 8
    o1 = jax.random.normal(keys[3], (B2, D2), dtype=jnp.float32)
    o2 = jax.random.normal(keys[4], (B2, D2), dtype=jnp.float32)
    lb = jax.random.bernoulli(keys[5], 0.5, (B2, 1)).astype(jnp.float32)

    loss2 = jax.block_until_ready(
        contrastive_loss(o1, o2, lb, margin=0.5, tile_b=TB2))
    ref2 = _reference_loss(o1, o2, lb, margin=0.5)
    assert jnp.allclose(loss2, ref2, rtol=1e-5, atol=1e-6), (loss2, ref2)

    # Case 3: bf16 embeddings (upcast to f32 inside the kernel).
    B3, D3 = 16, 64
    o1b = jax.random.normal(keys[6], (B3, D3), dtype=jnp.float32).astype(jnp.bfloat16)
    o2b = jax.random.normal(keys[7], (B3, D3), dtype=jnp.float32).astype(jnp.bfloat16)
    lb3 = jax.random.bernoulli(keys[8], 0.5, (B3, 1)).astype(jnp.float32)

    loss3 = jax.block_until_ready(contrastive_loss(o1b, o2b, lb3, margin=0.5))
    ref3 = _reference_loss(o1b.astype(jnp.float32), o2b.astype(jnp.float32),
                           lb3, margin=0.5)
    assert jnp.allclose(loss3, ref3, rtol=1e-5, atol=1e-5), (loss3, ref3)

    print("KERNEL_OK")
</pallas_src>

<mosaic_0001>
module attributes {stable_mosaic.version = 11 : i64} {
  func.func @_contrastive_loss_kernel(%arg0: i32, %arg1: i32, %arg2: memref<8x32xf32, #tpu.memory_space<vmem>>, %arg3: memref<8x32xf32, #tpu.memory_space<vmem>>, %arg4: memref<8x1xf32, #tpu.memory_space<vmem>>, %arg5: memref<1x1xf32, #tpu.memory_space<vmem>>, %arg6: memref<8x1xf32, #tpu.memory_space<vmem>>) attributes {dimension_semantics = [#tpu.dimension_semantics<parallel>, #tpu.dimension_semantics<arbitrary>], iteration_bounds = array<i64: 1, 1>, scalar_prefetch = 0 : i64, scratch_operands = 1 : i64, tpu.core_type = #tpu.core_type<tc>, window_params = [{transform_indices = @transform_0, window_bounds = array<i64: 8, 32>}, {transform_indices = @transform_1, window_bounds = array<i64: 8, 32>}, {transform_indices = @transform_2, window_bounds = array<i64: 8, 1>}, {transform_indices = @transform_3, window_bounds = array<i64: 1, 1>}]} {
    %c0_i32 = arith.constant 0 : i32
    %0 = arith.cmpi eq, %arg1, %c0_i32 : i32
    %1 = arith.extui %0 : i1 to i32
    %c0_i32_0 = arith.constant 0 : i32
    %2 = arith.cmpi ne, %1, %c0_i32_0 : i32
    scf.if %2 {
      %cst_16 = arith.constant 0.000000e+00 : f32
      %29 = vector.broadcast %cst_16 : f32 to vector<8x1xf32>
      %c0_17 = arith.constant 0 : index
      %c0_18 = arith.constant 0 : index
      %30 = vector.load %arg6[%c0_17, %c0_18] : memref<8x1xf32, #tpu.memory_space<vmem>>, vector<8x1xf32>
      tpu.vector_store %arg6[%c0_17, %c0_18], %29 {strides = array<i32>} : memref<8x1xf32, #tpu.memory_space<vmem>>, vector<8x1xf32>,
    } else {
    }
    %c0 = arith.constant 0 : index
    %c0_1 = arith.constant 0 : index
    %3 = vector.load %arg2[%c0, %c0_1] : memref<8x32xf32, #tpu.memory_space<vmem>>, vector<8x32xf32>
    %c0_2 = arith.constant 0 : index
    %c0_3 = arith.constant 0 : index
    %4 = vector.load %arg3[%c0_2, %c0_3] : memref<8x32xf32, #tpu.memory_space<vmem>>, vector<8x32xf32>
    %5 = arith.subf %3, %4 : vector<8x32xf32>
    %cst = arith.constant 9.99999997E-7 : f32
    %6 = vector.broadcast %cst : f32 to vector<8x32xf32>
    %7 = arith.addf %5, %6 : vector<8x32xf32>
    %8 = arith.mulf %7, %7 : vector<8x32xf32>
    %cst_4 = arith.constant dense<0.000000e+00> : vector<8xf32>
    %9 = vector.multi_reduction <add>, %8, %cst_4 [1] : vector<8x32xf32> to vector<8xf32>
    %10 = vector.shape_cast %9 : vector<8xf32> to vector<8x1xf32>
    %11 = math.sqrt %10 : vector<8x1xf32>
    %c0_5 = arith.constant 0 : index
    %c0_6 = arith.constant 0 : index
    %12 = vector.load %arg4[%c0_5, %c0_6] : memref<8x1xf32, #tpu.memory_space<vmem>>, vector<8x1xf32>
    %cst_7 = arith.constant 5.000000e-01 : f32
    %13 = vector.broadcast %cst_7 : f32 to vector<8x1xf32>
    %14 = arith.subf %13, %11 : vector<8x1xf32>
    %cst_8 = arith.constant 0.000000e+00 : f32
    %15 = vector.broadcast %cst_8 : f32 to vector<8x1xf32>
    %16 = arith.maximumf %14, %15 : vector<8x1xf32>
    %cst_9 = arith.constant 1.000000e+00 : f32
    %17 = vector.broadcast %cst_9 : f32 to vector<8x1xf32>
    %18 = arith.subf %17, %12 : vector<8x1xf32>
    %19 = arith.mulf %18, %10 : vector<8x1xf32>
    %20 = arith.mulf %16, %16 : vector<8x1xf32>
    %21 = arith.mulf %12, %20 : vector<8x1xf32>
    %22 = arith.addf %19, %21 : vector<8x1xf32>
    %c0_10 = arith.constant 0 : index
    %c0_11 = arith.constant 0 : index
    %23 = vector.load %arg6[%c0_10, %c0_11] : memref<8x1xf32, #tpu.memory_space<vmem>>, vector<8x1xf32>
    %24 = arith.addf %23, %22 : vector<8x1xf32>
    %c0_12 = arith.constant 0 : index
    %c0_13 = arith.constant 0 : index
    %25 = vector.load %arg6[%c0_12, %c0_13] : memref<8x1xf32, #tpu.memory_space<vmem>>, vector<8x1xf32>
    tpu.vector_store %arg6[%c0_12, %c0_13], %24 {strides = array<i32>} : memref<8x1xf32, #tpu.memory_space<vmem>>, vector<8x1xf32>,
    %c0_i32_14 = arith.constant 0 : i32
    %26 = arith.cmpi eq, %arg1, %c0_i32_14 : i32
    %27 = arith.extui %26 : i1 to i32
    %c0_i32_15 = arith.constant 0 : i32
    %28 = arith.cmpi ne, %27, %c0_i32_15 : i32
    scf.if %28 {
      %c0_16 = arith.constant 0 : index
      %c0_17 = arith.constant 0 : index
      %29 = vector.load %arg6[%c0_16, %c0_17] : memref<8x1xf32, #tpu.memory_space<vmem>>, vector<8x1xf32>
      %30 = vector.shape_cast %29 : vector<8x1xf32> to vector<1x8x1xf32>
      %cst_18 = arith.constant dense<0.000000e+00> : vector<1xf32>
      %31 = vector.multi_reduction <add>, %30, %cst_18 [1, 2] : vector<1x8x1xf32> to vector<1xf32>
      %32 = vector.shape_cast %31 : vector<1xf32> to vector<1x1x1xf32>
      %33 = vector.extract %32[0, 0, 0] : f32 from vector<1x1x1xf32>
      %34 = vector.broadcast %33 : f32 to vector<1x1xf32>
      %c0_19 = arith.constant 0 : index
      %c0_20 = arith.constant 0 : index
      %35 = vector.load %arg5[%c0_19, %c0_20] : memref<1x1xf32, #tpu.memory_space<vmem>>, vector<1x1xf32>
      tpu.vector_store %arg5[%c0_19, %c0_20], %34 {strides = array<i32>} : memref<1x1xf32, #tpu.memory_space<vmem>>, vector<1x1xf32>,
    } else {
    }
    return
  }
  func.func @transform_0(%arg0: i32, %arg1: i32) -> (i32, i32) {
    %c1_i32 = arith.constant 1 : i32
    %0 = arith.muli %arg0, %c1_i32 : i32
    %1 = arith.addi %0, %arg1 : i32
    %c0_i32 = arith.constant 0 : i32
    %2 = arith.minsi %1, %c0_i32 : i32
    %c0_i32_0 = arith.constant 0 : i32
    %c0_i32_1 = arith.constant 0 : i32
    return %2, %c0_i32_0 : i32, i32
  }
  func.func @transform_1(%arg0: i32, %arg1: i32) -> (i32, i32) {
    %c1_i32 = arith.constant 1 : i32
    %0 = arith.muli %arg0, %c1_i32 : i32
    %1 = arith.addi %0, %arg1 : i32
    %c0_i32 = arith.constant 0 : i32
    %2 = arith.minsi %1, %c0_i32 : i32
    %c0_i32_0 = arith.constant 0 : i32
    %c0_i32_1 = arith.constant 0 : i32
    return %2, %c0_i32_0 : i32, i32
  }
  func.func @transform_2(%arg0: i32, %arg1: i32) -> (i32, i32) {
    %c1_i32 = arith.constant 1 : i32
    %0 = arith.muli %arg0, %c1_i32 : i32
    %1 = arith.addi %0, %arg1 : i32
    %c0_i32 = arith.constant 0 : i32
    %2 = arith.minsi %1, %c0_i32 : i32
    %c0_i32_0 = arith.constant 0 : i32
    %c0_i32_1 = arith.constant 0 : i32
    return %2, %c0_i32_0 : i32, i32
  }
  func.func @transform_3(%arg0: i32, %arg1: i32) -> (i32, i32) {
    %c0_i32 = arith.constant 0 : i32
    %c0_i32_0 = arith.constant 0 : i32
    return %arg0, %c0_i32 : i32, i32
  }
}

</mosaic_0001>

<llo_original>
// kernel: tpu_custom_call.1
$region0: #{tpu_custom_call.1}
  #allocation0 [shape = 'u32[]', space=smem, size = 0x4, offset = 0x4, fixed_abs, tag = 'smem constant byte address 0x4 - core index']
  #allocation1 [shape = 'u32[72,128]{1,0:T(1,128)}', space=vmem, size = 0x9000, scoped, tag = 'internal scratch']
  #allocation2 [shape = 'f32[8,1]{1,0:T(8,128)}', space=vmem, size = 0x1000, scoped, tag = 'scratch operand']
  %s0 = inlined_call_operand.vmem [shape: f32[8,32], index: 0, kind: input, shape index: {}]
  %s1 = inlined_call_operand.hbm [shape: f32[8,32], index: 1, kind: input, shape index: {}]
  %s2 = inlined_call_operand.vmem [shape: f32[8,1], index: 2, kind: input, shape index: {}]
  %s3 = inlined_call_operand.hbm [shape: f32[1,1], index: 3, kind: output, shape index: {}]
  %s4 = sld [smem:[#allocation0]]
  $region34: #{tpu_custom_call.1} parent=0
    _
  %s6 = ssub.s32 1, %s4
  %s7 = scalar_select 0, %s6, %s4
  $region1: #{tpu_custom_call.1} parent=0
    #allocation3 [shape = 'u8[4096]{0}', space=vmem, size = 0x1000, scoped, tag = 'input window, operand 1, single buffered']
    #allocation4 [shape = 's32[1]{0}', space=sflag, size = 0x4, scoped, tag = 'scoped memory for tpu_custom_call.1']
    #allocation5 [shape = 's32[1]{0}', space=sflag, size = 0x4, scoped, tag = 'scoped memory for tpu_custom_call.1']
    #allocation6 [shape = 'u8[512]{0}', space=vmem, size = 0x400, scoped, tag = 'output window, operand 0, single buffered']
    %8 = vsyncpa [#allocation4], 0
    %9 = vsyncpa [#allocation5], 0
    // Predicated region
    $region2: #{tpu_custom_call.1} parent=1 // pred_check
      _
    $region3: #{tpu_custom_call.1} parent=1 // pred_check_branch
      %11 = sbr.rel (0) target = $region5
    $region4: #{tpu_custom_call.1} parent=1 // pred_region
      %s12 = sadd.s32 0, 0
      %p13 = scmp.lt.s32.totalorder %s12, 0
      %s14 = scalar_select %p13, %s12, 0
      %p15 = scmp.lt.s32.totalorder %s14, 0
      %s16 = scalar_select %p15, %s14, 0
      %s17 = smul.addr %s16, 8
      %s18 = scalar_lea.vmem %s0, %s17
      %s19 = sadd.s32 0, 0
      %p20 = scmp.lt.s32.totalorder %s19, 0
      %s21 = scalar_select %p20, %s19, 0
    $region5: #{tpu_custom_call.1} parent=1 // pred_fallthru
      _
    // Predicated region
    $region6: #{tpu_custom_call.1} parent=1 // pred_check
      _
    $region7: #{tpu_custom_call.1} parent=1 // pred_check_branch
      %23 = sbr.rel (0) target = $region9
    $region8: #{tpu_custom_call.1} parent=1 // pred_region
      %s24 = sadd.s32 0, 0
      %p25 = scmp.lt.s32.totalorder %s24, 0
      %s26 = scalar_select %p25, %s24, 0
      %28 = vsyncadd [#allocation4], 0
      %s29 = smul.addr %s26, 8
      %s30 = scalar_lea.hbm %s1, %s29
      %s32 = sshll.u32 %s30, 4
      %s33 = int_to_ptr.hbm [resolvable:$true] %s32
      %s34 = sshll.u32 [#allocation3], 4
      %s35 = int_to_ptr.vmem [resolvable:$true] %s34
      %37 = dma.hbm_to_vmem [thread:$0]  %s33, 128, %s35, [#allocation4]
    $region9: #{tpu_custom_call.1} parent=1 // pred_fallthru
      _
    // Predicated region
    $region10: #{tpu_custom_call.1} parent=1 // pred_check
      _
    $region11: #{tpu_custom_call.1} parent=1 // pred_check_branch
      %39 = sbr.rel (0) target = $region13
    $region12: #{tpu_custom_call.1} parent=1 // pred_region
      %s40 = sadd.s32 0, 0
      %p41 = scmp.lt.s32.totalorder %s40, 0
      %s42 = scalar_select %p41, %s40, 0
      %p43 = scmp.lt.s32.totalorder %s42, 0
      %s44 = scalar_select %p43, %s42, 0
      %s45 = smul.addr %s44, 8
      %s46 = scalar_lea.vmem %s2, %s45
      %s47 = sadd.s32 0, 0
      %p48 = scmp.lt.s32.totalorder %s47, 0
      %s49 = scalar_select %p48, %s47, 0
    $region13: #{tpu_custom_call.1} parent=1 // pred_fallthru
      _
    // Predicated region
    $region14: #{tpu_custom_call.1} parent=1 // pred_check
      _
    $region15: #{tpu_custom_call.1} parent=1 // pred_check_branch
      %51 = sbr.rel (0) target = $region17
    $region16: #{tpu_custom_call.1} parent=1 // pred_region
      %53 = dma.done [#allocation4], 128
    $region17: #{tpu_custom_call.1} parent=1 // pred_fallthru
      _
    %s54 = sadd.s32 0, 0
    %p55 = scmp.lt.s32.totalorder %s54, 0
    %s56 = scalar_select %p55, %s54, 0
    %p57 = scmp.lt.s32.totalorder %s56, 0
    %s58 = scalar_select %p57, %s56, 0
    %s59 = smul.addr %s58, 8
    %s60 = scalar_lea.vmem %s0, %s59
    %s61 = sadd.s32 0, 0
    %p62 = scmp.lt.s32.totalorder %s61, 0
    %s63 = scalar_select %p62, %s61, 0
    %p64 = scmp.lt.s32.totalorder %s63, 0
    %s65 = scalar_select %p64, %s63, 0
    %s66 = smul.addr %s65, 8
    %s67 = scalar_lea.vmem %s2, %s66
    %s68 = sadd.s32 0, 0
    %p69 = scmp.lt.s32.totalorder %s68, 0
    %s70 = scalar_select %p69, %s68, 0
    %p71 = scmp.lt.s32.totalorder %s70, 0
    %s72 = scalar_select %p71, %s70, 0
    %s73 = smul.addr %s72, 8
    %s74 = scalar_lea.vmem %s0, %s73
    %s75 = sadd.s32 0, 0
    %p76 = scmp.lt.s32.totalorder %s75, 0
    %s77 = scalar_select %p76, %s75, 0
    %s78 = sadd.s32 0, 0
    %p79 = scmp.lt.s32.totalorder %s78, 0
    %s80 = scalar_select %p79, %s78, 0
    %s81 = sadd.s32 0, 0
    %p82 = scmp.lt.s32.totalorder %s81, 0
    %s83 = scalar_select %p82, %s81, 0
    %p84 = scmp.lt.s32.totalorder %s83, 0
    %s85 = scalar_select %p84, %s83, 0
    %s86 = smul.addr %s85, 8
    %s87 = scalar_lea.vmem %s2, %s86
    %s88 = sadd.s32 0, 0
    %p89 = scmp.lt.s32.totalorder %s88, 0
    %s90 = scalar_select %p89, %s88, 0
    %p91 = scmp.eq.s32.totalorder 0, 0
    // Predicated region
    $region18: #{tpu_custom_call.1} parent=1 // pred_check
      %p92 = pneg %p91
    $region19: #{tpu_custom_call.1} parent=1 // pred_check_branch
      %94 = sbr.rel (%p92) target = $region21
    $region20: #{tpu_custom_call.1} parent=1 // pred_region
      %vm95 = vcmask 7168
      %96 = vst.msk [vmem:[#allocation2] sm:$0xff] %vm95, 0.0
    $region21: #{tpu_custom_call.1} parent=1 // pred_fallthru
      _
    %v97 = vld [vmem:[%s74] sm:$0xff]
    %v98 = vld [vmem:[#allocation3] sm:$0xff]
    %v99 = vsub.f32 %v97, %v98
    %v100 = vadd.f32 %v99, 1e-06
    %v101 = vmul.f32 %v100, %v100
    %vm102 = vcmask 261120
    %v103 = vsel %vm102, %v101, 0.0
    %104 = vadd.xlane.f32.xlu0 %v103
    %v105 = vpop.xlane.xlu0 %104
    %v106 = vrsqrt.pop %v105
    %v107 = vmul.f32 %v106, %v105
    %v108 = vmul.f32 %v107, %v106
    %v109 = vmul.f32 0.5, %v108
    %v110 = vsub.f32 1.5, %v109
    %v111 = vmul.f32 %v106, %v110
    %v112 = vmul.f32 %v105, %v111
    %vm113 = vcmp.eq.f32.partialorder %v105, inf
    %v114 = vsel %vm113, %v105, %v112
    %vm115 = vcmp.eq.f32.partialorder %v105, 0.0
    %v116 = vand.u32 %v105, 2147483648
    %v117 = vsel %vm115, %v116, %v114
    %v118 = vld [vmem:[%s87] sm:$0xff]
    %v119 = vsub.f32 0.5, %v117
    %v120 = vmax.f32 %v119, 0.0
    %v121 = vsub.f32 1.0, %v118
    %v122 = vmul.f32 %v121, %v105
    %v123 = vmul.f32 %v120, %v120
    %v124 = vmul.f32 %v118, %v123
    %v125 = vadd.f32 %v122, %v124
    %v126 = vld [vmem:[#allocation2] sm:$0xff]
    %v127 = vadd.f32 %v126, %v125
    %vm128 = vcmask 7168
    %129 = vst.msk [vmem:[#allocation2] sm:$0xff] %vm128, %v127
    // Predicated region
    $region22: #{tpu_custom_call.1} parent=1 // pred_check
      %p130 = pneg %p91
    $region23: #{tpu_custom_call.1} parent=1 // pred_check_branch
      %132 = sbr.rel (%p130) target = $region25
    $region24: #{tpu_custom_call.1} parent=1 // pred_region
      %v133 = vld [vmem:[#allocation2] sm:$0xff]
      %v134 = vsel %vm128, %v133, 0.0
      %135 = vadd.xlane.f32.xlu0 %v134
      %v136 = vpop.xlane.xlu0 %135
      %v137 = vrot.slane %v136, 4
      %v138 = vadd.f32 %v136, %v137
      %v139 = vrot.slane %v138, 2
      %v140 = vadd.f32 %v138, %v139
      %v141 = vrot.slane %v140, 1
      %v142 = vadd.f32 %v140, %v141
      %s143 = vtos %v142
      %v144 = vstv %s143
      %vm145 = vcmask 0
      %146 = vst.msk [vmem:[#allocation6] sm:$0x1] %vm145, %v144
    $region25: #{tpu_custom_call.1} parent=1 // pred_fallthru
      _
    // Predicated region
    $region26: #{tpu_custom_call.1} parent=1 // pred_check
      _
    $region27: #{tpu_custom_call.1} parent=1 // pred_check_branch
      %148 = sbr.rel (0) target = $region29
    $region28: #{tpu_custom_call.1} parent=1 // pred_region
      %150 = vsyncadd [#allocation5], 0
      %s152 = sshll.u32 [#allocation6], 4
      %s153 = int_to_ptr.vmem [resolvable:$true] %s152
      %s154 = sshll.u32 %s3, 4
      %s155 = int_to_ptr.hbm [resolvable:$true] %s154
      %157 = dma.vmem_to_hbm [thread:$0]  %s153, 16, %s155, [#allocation5]
    $region29: #{tpu_custom_call.1} parent=1 // pred_fallthru
      _
    // Predicated region
    $region30: #{tpu_custom_call.1} parent=1 // pred_check
      _
    $region31: #{tpu_custom_call.1} parent=1 // pred_check_branch
      %159 = sbr.rel (0) target = $region33
    $region32: #{tpu_custom_call.1} parent=1 // pred_region
      %161 = dma.done [#allocation5], 16
    $region33: #{tpu_custom_call.1} parent=1 // pred_fallthru
      _
    %162 = vsyncpa [#allocation4], 1
    %163 = vsyncpa [#allocation5], 1

</llo_original>
